<compile_context>
chip_gen: v7x
topology: tpu7x:2x2x1
jax: 0.10.0
libtpu: 0.0.40
codegen_flags: <defaults>
</compile_context>

<pallas_src>
import warnings

import jax
import jax.numpy as jnp
from jax.experimental import pallas as pl
from jax.experimental.pallas import tpu as pltpu


# ---------------------------------------------------------------------------
# VMEM-aware tile sizing.
# ---------------------------------------------------------------------------
def _target_slab_bytes():
    """Per-block slab target.  Double-buffered x+out = 4x this figure."""
    try:
        vmem = getattr(pltpu.get_tpu_info(), "vmem_capacity_bytes", 64 * 1024 * 1024)
    except Exception:  # e.g. interpret mode / older runtimes
        vmem = 64 * 1024 * 1024
    # v7x: 64 MiB physical VMEM per TC -> 4 MiB slabs; v5e/v6e (128 MiB) -> 8 MiB.
    return (8 if vmem > 64 * 1024 * 1024 else 4) * 1024 * 1024


def _choose_seq_tile(seq_len, embed, itemsize, target_bytes):
    """Largest multiple-of-8 divisor of seq_len whose (tile, embed) slab is
    <= target_bytes.  Only called when seq_len % 8 == 0."""
    max_rows = max(8, (target_bytes // max(1, embed * itemsize)) // 8 * 8)
    ts = min(seq_len, max_rows)
    ts -= ts % 8
    ts = max(ts, 8)
    while seq_len % ts != 0:
        ts -= 8
    return ts


def _choose_batch_tile(batch, seq_len, embed, itemsize, target_bytes):
    """Batch-tile size: as many full (S, E) rows as fit in the target slab,
    capped so the grid has >= 2 steps whenever batch >= 2 (v7x megacore)."""
    row_bytes = max(1, seq_len * embed * itemsize)
    tb = max(1, target_bytes // row_bytes)
    tb = min(tb, batch)
    if batch >= 2:
        tb = max(1, min(tb, batch // 2))
    while batch % tb != 0:
        tb -= 1
    return tb


# ---------------------------------------------------------------------------
# Path A: dense blend (two tiling variants).
# ---------------------------------------------------------------------------
def _pos_mask_seq_kernel(x_ref, mask_ref, tok_ref, o_ref):
    # x_ref/o_ref: (1, TS, E)   mask_ref: (S, 1) fully resident   tok_ref: (1, E)
    ts = x_ref.shape[1]
    start = pl.multiple_of(pl.program_id(1) * ts, 8)
    m = mask_ref[pl.ds(start, ts), :] > 0           # mask is exactly {0,1} -> select is exact
    o_ref[...] = jnp.where(m[None], tok_ref[...][None], x_ref[...])


def _pos_mask_batch_kernel(x_ref, mask_ref, tok_ref, o_ref):
    # x_ref/o_ref: (TB, S, E)   mask_ref: (S, 1)   tok_ref: (1, E)
    m = mask_ref[...] > 0
    o_ref[...] = jnp.where(m[None], tok_ref[...][None], x_ref[...])


def positional_masking(x, bool_masked_pos, mask_token, *, target_slab_bytes=None):
    """Dense path. x: (B, S, E); bool_masked_pos: (S,) in {0,1}; mask_token: (E,)."""
    B, S, E = x.shape
    itemsize = jnp.dtype(x.dtype).itemsize
    # Keep activation dtype end-to-end (bf16 stays bf16 -> half the HBM bytes).
    mask2d = bool_masked_pos.astype(x.dtype).reshape(S, 1)
    tok2d = mask_token.astype(x.dtype).reshape(1, E)

    target = _target_slab_bytes() if target_slab_bytes is None else target_slab_bytes
    # x + out, each double-buffered, plus headroom for the resident mask/token.
    vmem_limit = 4 * target + (16 << 20)
    row_bytes = S * E * itemsize

    if S % 8 == 0 and row_bytes > target:
        # Sequence tiling within each batch row (one row is already a big slab).
        ts = _choose_seq_tile(S, E, itemsize, target)
        grid = (B, S // ts)
        in_specs = [
            pl.BlockSpec((1, ts, E), lambda b, s: (b, s, 0)),   # x tile
            pl.BlockSpec((S, 1), lambda b, s: (0, 0)),          # mask: fully resident
            pl.BlockSpec((1, E), lambda b, s: (0, 0)),          # token: fully resident
        ]
        out_spec = pl.BlockSpec((1, ts, E), lambda b, s: (b, s, 0))
        kernel = _pos_mask_seq_kernel
        semantics = ("parallel", "parallel")
    else:
        # Batch tiling (small / oddly-shaped rows, e.g. ViT S=197).
        tb = _choose_batch_tile(B, S, E, itemsize, target)
        grid = (B // tb,)
        in_specs = [
            pl.BlockSpec((tb, S, E), lambda b: (b, 0, 0)),
            pl.BlockSpec((S, 1), lambda b: (0, 0)),
            pl.BlockSpec((1, E), lambda b: (0, 0)),
        ]
        out_spec = pl.BlockSpec((tb, S, E), lambda b: (b, 0, 0))
        kernel = _pos_mask_batch_kernel
        semantics = ("parallel",)

    # NOTE: for best store throughput E should be a multiple of 128 (lane-dense
    # output); smaller E still works (block == full dim) but uses masked stores.
    return pl.pallas_call(
        kernel,
        out_shape=jax.ShapeDtypeStruct((B, S, E), x.dtype),
        grid=grid,
        in_specs=in_specs,
        out_specs=out_spec,
        compiler_params=pltpu.CompilerParams(
            dimension_semantics=semantics,
            vmem_limit_bytes=vmem_limit,
        ),
    )(x, mask2d, tok2d)


# ---------------------------------------------------------------------------
# Path B: sparse scatter of the mask token into the masked rows only.
# ---------------------------------------------------------------------------
def _pos_mask_scatter_kernel(idx_ref, x_hbm_ref, tok_ref, o_ref):
    # idx_ref:   (3,) int32 scalar-prefetch (consumed by the index maps)
    # x_hbm_ref: aliased x in ANY/HBM space — never read, only carries the alias
    # tok_ref:   (1, E) resident mask token
    # o_ref:     (B, 1, 1, E) all batch rows of the selected masked position
    del idx_ref, x_hbm_ref
    o_ref[...] = jnp.broadcast_to(tok_ref[...][None, None], o_ref.shape)


def positional_masking_sparse(x, pos_masked_indices, mask_token):
    """Writes the mask token only at the masked positions (all batch rows at
    once); everything else is the aliased input.  For the bandwidth win, call
    under jax.jit(..., donate_argnums=0) so the alias is honored; otherwise XLA
    inserts a defensive copy (still correct)."""
    B, S, E = x.shape
    n_masked = int(pos_masked_indices.shape[0])

    # (B, S, 1, E) view so the x/out block's last two dims equal full array dims.
    x4 = x.reshape(B, S, 1, E)
    tok2d = mask_token.astype(x.dtype).reshape(1, E)
    idx = pos_masked_indices.astype(jnp.int32)

    # One grid step per masked position; the block covers all B batch rows.
    out_spec = pl.BlockSpec(
        (B, 1, 1, E), lambda j, idx_ref: (0, idx_ref[j], 0, 0)
    )

    out4 = pl.pallas_call(
        _pos_mask_scatter_kernel,
        out_shape=jax.ShapeDtypeStruct((B, S, 1, E), x.dtype),
        grid_spec=pltpu.PrefetchScalarGridSpec(
            num_scalar_prefetch=1,
            grid=(n_masked,),
            in_specs=[
                pl.BlockSpec(memory_space=pl.ANY),                  # aliased x, never read/DMA'd
                pl.BlockSpec((1, E), lambda j, idx_ref: (0, 0)),    # resident token
            ],
            out_specs=out_spec,
        ),
        # flat input order is (idx, x4, tok2d) -> x4 is input 1; alias it to output 0
        input_output_aliases={1: 0},
        compiler_params=pltpu.CompilerParams(
            dimension_semantics=("arbitrary",),   # data-dependent output blocks
        ),
    )(idx, x4, tok2d)
    return out4.reshape(B, S, E)


# Donated variant: the intended production entry point for path B.
positional_masking_sparse_donated = jax.jit(
    positional_masking_sparse, donate_argnums=(0,)
)


# ---------------------------------------------------------------------------
# Demo / correctness check.
# ---------------------------------------------------------------------------
def _run_case(key, batch_size, max_seq_len, embed_size, dense_target=None):
    k_x, k_idx, k_tok = jax.random.split(key, 3)
    x = jax.random.normal(k_x, (batch_size, max_seq_len, embed_size), jnp.float32)
    # Module inits mask_token to zeros; use a small deterministic vector so the
    # masking effect is visible in the check.
    mask_token = 0.1 * jax.random.normal(k_tok, (embed_size,), jnp.float32)

    # torch.multinomial(ones(S), 3, replacement=False) equivalent (host-side glue).
    pos_masked_indices = jax.random.choice(
        k_idx, max_seq_len, shape=(3,), replace=False
    ).astype(jnp.int32)
    bool_masked_pos = (
        jnp.zeros((max_seq_len,), jnp.float32).at[pos_masked_indices].set(1.0)
    )

    # Pure-JAX reference (exactly the module's forward).
    m = bool_masked_pos[None, :, None]
    ref = x * (1.0 - m) + mask_token[None, None, :] * m

    out_dense = jax.block_until_ready(
        positional_masking(x, bool_masked_pos, mask_token, target_slab_bytes=dense_target)
    )
    assert jnp.allclose(out_dense, ref, atol=1e-6), "dense kernel mismatch"

    out_sparse = jax.block_until_ready(
        positional_masking_sparse(x, pos_masked_indices, mask_token)
    )
    assert jnp.allclose(out_sparse, ref, atol=1e-6), "sparse kernel mismatch"

    # Donated variant (the fast path): feed a fresh copy so x stays live for ref.
    x_copy = x + 0.0
    out_sparse_don = jax.block_until_ready(
        positional_masking_sparse_donated(x_copy, pos_masked_indices, mask_token)
    )
    assert jnp.allclose(out_sparse_don, ref, atol=1e-6), "donated sparse kernel mismatch"


if __name__ == "__main__":
    warnings.filterwarnings("ignore", message="Some donated buffers were not usable")

    key = jax.random.PRNGKey(0)
    k1, k2, k3 = jax.random.split(key, 3)

    # Primary small case: E = 128 -> lane-dense stores; exercises the batch-tiling path.
    _run_case(k1, batch_size=2, max_seq_len=8, embed_size=128)
    # Toy scale matching the module (E=32, block == full dim -> still legal).
    _run_case(k2, batch_size=2, max_seq_len=16, embed_size=32)
    # Force the sequence-tiling path with a tiny slab target (still small shapes).
    _run_case(k3, batch_size=2, max_seq_len=64, embed_size=128, dense_target=16 * 128 * 4)

    print("KERNEL_OK")
</pallas_src>

<mosaic_0001>
module attributes {stable_mosaic.version = 11 : i64} {
  func.func @_pos_mask_batch_kernel(%arg0: i32, %arg1: memref<1x8x128xf32, #tpu.memory_space<vmem>>, %arg2: memref<8x1xf32, #tpu.memory_space<vmem>>, %arg3: memref<1x128xf32, #tpu.memory_space<vmem>>, %arg4: memref<1x8x128xf32, #tpu.memory_space<vmem>>) attributes {dimension_semantics = [#tpu.dimension_semantics<parallel>], iteration_bounds = array<i64: 2>, scalar_prefetch = 0 : i64, scratch_operands = 0 : i64, tpu.core_type = #tpu.core_type<tc>, window_params = [{transform_indices = @transform_0, window_bounds = array<i64: 1, 8, 128>}, {pipeline_mode = #tpu.pipeline_mode<synchronous>, transform_indices = @transform_1, window_bounds = array<i64: 8, 1>}, {pipeline_mode = #tpu.pipeline_mode<synchronous>, transform_indices = @transform_2, window_bounds = array<i64: 1, 128>}, {transform_indices = @transform_3, window_bounds = array<i64: 1, 8, 128>}]} {
    %c0 = arith.constant 0 : index
    %c0_0 = arith.constant 0 : index
    %0 = vector.load %arg2[%c0, %c0_0] : memref<8x1xf32, #tpu.memory_space<vmem>>, vector<8x1xf32>
    %cst = arith.constant 0.000000e+00 : f32
    %1 = vector.broadcast %cst : f32 to vector<8x1xf32>
    %2 = arith.cmpf ogt, %0, %1 : vector<8x1xf32>
    %3 = vector.shape_cast %2 : vector<8x1xi1> to vector<1x8x1xi1>
    %c0_1 = arith.constant 0 : index
    %c0_2 = arith.constant 0 : index
    %4 = vector.load %arg3[%c0_1, %c0_2] : memref<1x128xf32, #tpu.memory_space<vmem>>, vector<1x128xf32>
    %5 = vector.shape_cast %4 : vector<1x128xf32> to vector<1x1x128xf32>
    %c0_3 = arith.constant 0 : index
    %c0_4 = arith.constant 0 : index
    %c0_5 = arith.constant 0 : index
    %6 = vector.load %arg1[%c0_3, %c0_4, %c0_5] : memref<1x8x128xf32, #tpu.memory_space<vmem>>, vector<1x8x128xf32>
    %7 = vector.shape_cast %3 : vector<1x8x1xi1> to vector<1x8x1xi1>
    %8 = vector.broadcast %7 : vector<1x8x1xi1> to vector<1x8x128xi1>
    %9 = vector.shape_cast %5 : vector<1x1x128xf32> to vector<1x1x128xf32>
    %10 = vector.broadcast %9 : vector<1x1x128xf32> to vector<1x8x128xf32>
    %11 = arith.select %8, %10, %6 : vector<1x8x128xi1>, vector<1x8x128xf32>
    %c0_6 = arith.constant 0 : index
    %c0_7 = arith.constant 0 : index
    %c0_8 = arith.constant 0 : index
    %12 = vector.load %arg4[%c0_6, %c0_7, %c0_8] : memref<1x8x128xf32, #tpu.memory_space<vmem>>, vector<1x8x128xf32>
    tpu.vector_store %arg4[%c0_6, %c0_7, %c0_8], %11 {strides = array<i32>} : memref<1x8x128xf32, #tpu.memory_space<vmem>>, vector<1x8x128xf32>,
    return
  }
  func.func @transform_0(%arg0: i32) -> (i32, i32, i32) {
    %c0_i32 = arith.constant 0 : i32
    %c0_i32_0 = arith.constant 0 : i32
    %c0_i32_1 = arith.constant 0 : i32
    return %arg0, %c0_i32, %c0_i32_0 : i32, i32, i32
  }
  func.func @transform_1(%arg0: i32) -> (i32, i32) {
    %c0_i32 = arith.constant 0 : i32
    %c0_i32_0 = arith.constant 0 : i32
    %c0_i32_1 = arith.constant 0 : i32
    return %c0_i32, %c0_i32_0 : i32, i32
  }
  func.func @transform_2(%arg0: i32) -> (i32, i32) {
    %c0_i32 = arith.constant 0 : i32
    %c0_i32_0 = arith.constant 0 : i32
    %c0_i32_1 = arith.constant 0 : i32
    return %c0_i32, %c0_i32_0 : i32, i32
  }
  func.func @transform_3(%arg0: i32) -> (i32, i32, i32) {
    %c0_i32 = arith.constant 0 : i32
    %c0_i32_0 = arith.constant 0 : i32
    %c0_i32_1 = arith.constant 0 : i32
    return %arg0, %c0_i32, %c0_i32_0 : i32, i32, i32
  }
}

</mosaic_0001>

<llo_original>
// kernel: tpu_custom_call.1
$region0: #{tpu_custom_call.1}
  #allocation0 [shape = 'u32[]', space=smem, size = 0x4, offset = 0x4, fixed_abs, tag = 'smem constant byte address 0x4 - core index']
  #allocation1 [shape = 'u32[144,128]{1,0:T(1,128)}', space=vmem, size = 0x12000, scoped, tag = 'internal scratch']
  %s0 = inlined_call_operand.hbm [shape: f32[2,8,128], index: 0, kind: input, shape index: {}]
  %s1 = inlined_call_operand.vmem [shape: f32[8,1], index: 1, kind: input, shape index: {}]
  %s2 = inlined_call_operand.vmem [shape: f32[1,128], index: 2, kind: input, shape index: {}]
  %s3 = inlined_call_operand.hbm [shape: f32[2,8,128], index: 3, kind: output, shape index: {}]
  %s4 = sld [smem:[#allocation0]]
  $region49: #{tpu_custom_call.1} parent=0
    _
  %s6 = ssub.s32 1, %s4
  %s7 = scalar_select 0, %s6, %s4
  $region1: #{tpu_custom_call.1} parent=0
    #allocation2 [shape = 'u8[8192]{0}', space=vmem, size = 0x2000, scoped, tag = 'input window, operand 0']
    #allocation3 [shape = 's32[2]{0}', space=sflag, size = 0x8, scoped, tag = 'scoped memory for tpu_custom_call.1']
    #allocation4 [shape = 's32[2]{0}', space=sflag, size = 0x8, scoped, tag = 'scoped memory for tpu_custom_call.1']
    #allocation5 [shape = 'u8[8192]{0}', space=vmem, size = 0x2000, scoped, tag = 'output window, operand 0']
    %8 = vsyncpa [#allocation3], 0
    %s9 = scalar_lea.sflag [#allocation3], 1
    %10 = vsyncpa %s9, 0
    %11 = vsyncpa [#allocation4], 0
    %s12 = scalar_lea.sflag [#allocation4], 1
    %13 = vsyncpa %s12, 0
    loop: start=0, step=1, limit=4
    $region2: #{tpu_custom_call.1} parent=1 // loop_pre_header
      _
    $region3: #{tpu_custom_call.1} parent=1 // loop_header
      %s15 = sphi 0, %s19
      %p16 = scmp.ge.s32.totalorder %s15, 4
      %s25 = sphi 0, %s27
      %s28 = sphi 0, %s25
      %s29 = sphi 0, %s28
      %s45 = sphi 0, %s29
      %s49 = sphi 0, %s49
      %s51 = sphi 0, %s49
      %s52 = sphi 0, %s51
      %s66 = sphi 0, %s52
      %s70 = sphi 0, %s70
      %s72 = sphi 0, %s70
      %s73 = sphi 0, %s72
      %s87 = sphi 0, %s73
      %s93 = sphi 0, %s95
      %s96 = sphi 0, %s93
      %s97 = sphi 0, %s96
      %s113 = sphi 0, %s97
    $region4: #{tpu_custom_call.1} parent=1 // loop_header_branch
      %18 = sbr.rel (%p16) target = $region8
    $region5: #{tpu_custom_call.1} parent=1 // loop_body
      %s20 = ssub.s32 %s15, 1
      %s21 = ssub.s32 %s15, 2
      %s22 = sadd.s32 %s15, 1
      %s23 = ssub.s32 %s15, %s22
      %p24 = scmp.eq.s32.totalorder %s23, 0
      %s26 = sadd.s32 %s25, 1
      %s27 = scalar_select %p24, %s25, %s26
      %p30 = pneg %p24
      %p31 = scmp.eq.s32.totalorder %s15, 1
      %p32 = por %p30, %p31
      %p33 = scmp.ne.s32.totalorder %s25, %s28
      %p34 = scmp.eq.s32.totalorder %s15, 0
      %p35 = por %p33, %p34
      %p36 = scmp.ne.s32.totalorder %s25, %s28
      %p37 = scmp.eq.s32.totalorder %s20, 1
      %p38 = por %p36, %p37
      %p39 = scmp.ne.s32.totalorder %s28, %s29
      %p40 = scmp.eq.s32.totalorder %s20, 0
      %p41 = por %p39, %p40
      %p42 = scmp.ne.s32.totalorder %s28, %s29
      %p43 = scmp.eq.s32.totalorder %s21, 1
      %p44 = por %p42, %p43
      %p46 = scmp.ne.s32.totalorder %s29, %s45
      %p47 = scmp.eq.s32.totalorder %s21, 0
      %p48 = por %p46, %p47
      %s50 = sadd.s32 %s49, 1
      %p53 = scmp.eq.s32.totalorder %s15, 1
      %p54 = scmp.ne.s32.totalorder %s49, %s51
      %p55 = scmp.eq.s32.totalorder %s15, 0
      %p56 = por %p54, %p55
      %p57 = scmp.ne.s32.totalorder %s49, %s51
      %p58 = scmp.eq.s32.totalorder %s20, 1
      %p59 = por %p57, %p58
      %p60 = scmp.ne.s32.totalorder %s51, %s52
      %p61 = scmp.eq.s32.totalorder %s20, 0
      %p62 = por %p60, %p61
      %p63 = scmp.ne.s32.totalorder %s51, %s52
      %p64 = scmp.eq.s32.totalorder %s21, 1
      %p65 = por %p63, %p64
      %p67 = scmp.ne.s32.totalorder %s52, %s66
      %p68 = scmp.eq.s32.totalorder %s21, 0
      %p69 = por %p67, %p68
      %s71 = sadd.s32 %s70, 1
      %p74 = scmp.eq.s32.totalorder %s15, 1
      %p75 = scmp.ne.s32.totalorder %s70, %s72
      %p76 = scmp.eq.s32.totalorder %s15, 0
      %p77 = por %p75, %p76
      %p78 = scmp.ne.s32.totalorder %s70, %s72
      %p79 = scmp.eq.s32.totalorder %s20, 1
      %p80 = por %p78, %p79
      %p81 = scmp.ne.s32.totalorder %s72, %s73
      %p82 = scmp.eq.s32.totalorder %s20, 0
      %p83 = por %p81, %p82
      %p84 = scmp.ne.s32.totalorder %s72, %s73
      %p85 = scmp.eq.s32.totalorder %s21, 1
      %p86 = por %p84, %p85
      %p88 = scmp.ne.s32.totalorder %s73, %s87
      %p89 = scmp.eq.s32.totalorder %s21, 0
      %p90 = por %p88, %p89
      %s91 = ssub.s32 %s15, %s22
      %p92 = scmp.eq.s32.totalorder %s91, 0
      %s94 = sadd.s32 %s93, 1
      %s95 = scalar_select %p92, %s93, %s94
      %p98 = pneg %p92
      %p99 = scmp.eq.s32.totalorder %s15, 1
      %p100 = por %p98, %p99
      %p101 = scmp.ne.s32.totalorder %s93, %s96
      %p102 = scmp.eq.s32.totalorder %s15, 0
      %p103 = por %p101, %p102
      %p104 = scmp.ne.s32.totalorder %s93, %s96
      %p105 = scmp.eq.s32.totalorder %s20, 1
      %p106 = por %p104, %p105
      %p107 = scmp.ne.s32.totalorder %s96, %s97
      %p108 = scmp.eq.s32.totalorder %s20, 0
      %p109 = por %p107, %p108
      %p110 = scmp.ne.s32.totalorder %s96, %s97
      %p111 = scmp.eq.s32.totalorder %s21, 1
      %p112 = por %p110, %p111
      %p114 = scmp.ne.s32.totalorder %s97, %s113
      %p115 = scmp.eq.s32.totalorder %s21, 0
      %p116 = por %p114, %p115
      %p117 = scmp.le.s32.totalorder 1, %s15
      %p118 = scmp.lt.s32.totalorder %s15, 3
      %p119 = pnand %p117, %p118
      %p120 = pneg %p119
      // Predicated region
      $region9: #{tpu_custom_call.1} parent=5 // pred_check
        _
      $region10: #{tpu_custom_call.1} parent=5 // pred_check_branch
        %122 = sbr.rel (%p119) target = $region12
      $region11: #{tpu_custom_call.1} parent=5 // pred_region
        %s123 = ssub.s32 %s15, 1
        // Predicated region
        $region13: #{tpu_custom_call.1} parent=11 // pred_check
          %p124 = pneg %p62
        $region14: #{tpu_custom_call.1} parent=11 // pred_check_branch
          %126 = sbr.rel (%p124) target = $region16
        $region15: #{tpu_custom_call.1} parent=11 // pred_region
          _
        $region16: #{tpu_custom_call.1} parent=11 // pred_fallthru
          _
        // Predicated region
        $region17: #{tpu_custom_call.1} parent=11 // pred_check
          %p127 = pneg %p83
        $region18: #{tpu_custom_call.1} parent=11 // pred_check_branch
          %129 = sbr.rel (%p127) target = $region20
        $region19: #{tpu_custom_call.1} parent=11 // pred_region
          _
        $region20: #{tpu_custom_call.1} parent=11 // pred_fallthru
          _
      $region12: #{tpu_custom_call.1} parent=5 // pred_fallthru
        _
      %p130 = scmp.lt.s32.totalorder %s15, 2
      // Predicated region
      $region21: #{tpu_custom_call.1} parent=5 // pred_check
        %p131 = pneg %p130
      $region22: #{tpu_custom_call.1} parent=5 // pred_check_branch
        %133 = sbr.rel (%p131) target = $region24
      $region23: #{tpu_custom_call.1} parent=5 // pred_region
        // Predicated region
        $region25: #{tpu_custom_call.1} parent=23 // pred_check
          %p134 = pneg %p35
        $region26: #{tpu_custom_call.1} parent=23 // pred_check_branch
          %136 = sbr.rel (%p134) target = $region28
        $region27: #{tpu_custom_call.1} parent=23 // pred_region
          %s137 = sand.u32 %s25, 1
          %s138 = scalar_lea.sflag [#allocation3], %s137
          %s139 = sand.u32 %s25, 1
          %s140 = smul.addr %s139, 8
          %s141 = scalar_lea.vmem [#allocation2], %s140
          %s143 = ssub.s32 128, 128
          %144 = vsyncadd %s138, %s143
          %s145 = smul.addr %s15, 128
          %s146 = scalar_lea.hbm %s0, %s145
          %s148 = sshll.u32 %s141, 4
          %s149 = int_to_ptr.vmem [resolvable:$true] %s148
          %151 = dma.hbm_to_vmem [thread:$0]  %s146, 128, %s149, %s138
        $region28: #{tpu_custom_call.1} parent=23 // pred_fallthru
          _
      $region24: #{tpu_custom_call.1} parent=5 // pred_fallthru
        _
      %p152 = scmp.le.s32.totalorder 1, %s15
      %p153 = scmp.lt.s32.totalorder %s15, 3
      %p154 = pnand %p152, %p153
      %p155 = pneg %p154
      // Predicated region
      $region29: #{tpu_custom_call.1} parent=5 // pred_check
        _
      $region30: #{tpu_custom_call.1} parent=5 // pred_check_branch
        %157 = sbr.rel (%p154) target = $region32
      $region31: #{tpu_custom_call.1} parent=5 // pred_region
        %s158 = ssub.s32 %s15, 1
        %s159 = sand.u32 %s28, 1
        %s160 = scalar_lea.sflag [#allocation3], %s159
        %s161 = sand.u32 %s28, 1
        %s162 = smul.addr %s161, 8
        %s163 = scalar_lea.vmem [#allocation2], %s162
        // Predicated region
        $region33: #{tpu_custom_call.1} parent=31 // pred_check
          %p164 = pneg %p41
        $region34: #{tpu_custom_call.1} parent=31 // pred_check_branch
          %166 = sbr.rel (%p164) target = $region36
        $region35: #{tpu_custom_call.1} parent=31 // pred_region
          %167 = dma.done %s160, 128
        $region36: #{tpu_custom_call.1} parent=31 // pred_fallthru
          _
        %s168 = sand.u32 %s28, 1
        %s169 = scalar_lea.sflag [#allocation3], %s168
        %s170 = sand.u32 %s28, 1
        %s171 = smul.addr %s170, 8
        %s172 = scalar_lea.vmem [#allocation2], %s171
        %p173 = pneg %p41
        %p174 = pneg %p38
        %p175 = pneg %p62
        %p176 = pneg %p59
        %p177 = pneg %p83
        %p178 = pneg %p80
        %p179 = pneg %p109
        %p180 = pneg %p106
        %s181 = sand.u32 %s96, 1
        %s182 = scalar_lea.sflag [#allocation4], %s181
        %s183 = sand.u32 %s96, 1
        %s184 = smul.addr %s183, 8
        %s185 = scalar_lea.vmem [#allocation5], %s184
        %v186 = vld [vmem:[%s1] sm:$0xff]
        %vm187 = vcmp.gt.f32.partialorder %v186, 0.0
        %v188 = vld [vmem:[%s2] sm:$0x1]
        %v189 = vld [vmem:[%s163] sm:$0xff]
        %v190 = vsel %vm187, 1, 0
        %191 = vset.pattern.permute.xlu0 0
        %192 = vperm.xlu0 %191, %v190
        %v193 = vpop.permute.xlu0 %192
        %vm194 = vcmp.eq.s32.totalorder %v193, 1
        %v196 = vlaneseq
        %v197 = vshrl.u32 %v196, 7
        %v198 = vsub.s32 0, %v197
        %v199 = vrot.slane %v188, %v198
        %v201 = vsel %vm194, %v199, %v189
        %202 = vst [vmem:[%s185] sm:$0xff] %v201
        %s203 = sand.u32 %s96, 1
        %s204 = scalar_lea.sflag [#allocation4], %s203
        %s205 = sand.u32 %s96, 1
        %s206 = smul.addr %s205, 8
        %s207 = scalar_lea.vmem [#allocation5], %s206
        // Predicated region
        $region37: #{tpu_custom_call.1} parent=31 // pred_check
          %p208 = pneg %p106
        $region38: #{tpu_custom_call.1} parent=31 // pred_check_branch
          %210 = sbr.rel (%p208) target = $region40
        $region39: #{tpu_custom_call.1} parent=31 // pred_region
          %s212 = ssub.s32 128, 128
          %213 = vsyncadd %s204, %s212
          %s214 = smul.addr %s20, 128
          %s215 = scalar_lea.hbm %s3, %s214
          %s217 = sshll.u32 %s207, 4
          %s218 = int_to_ptr.vmem [resolvable:$true] %s217
          %220 = dma.vmem_to_hbm [thread:$0]  %s218, 128, %s215, %s204
        $region40: #{tpu_custom_call.1} parent=31 // pred_fallthru
          _
      $region32: #{tpu_custom_call.1} parent=5 // pred_fallthru
        _
      %p221 = scmp.le.s32.totalorder 2, %s15
      // Predicated region
      $region41: #{tpu_custom_call.1} parent=5 // pred_check
        %p222 = pneg %p221
      $region42: #{tpu_custom_call.1} parent=5 // pred_check_branch
        %224 = sbr.rel (%p222) target = $region44
      $region43: #{tpu_custom_call.1} parent=5 // pred_region
        %s225 = ssub.s32 %s15, 2
        // Predicated region
        $region45: #{tpu_custom_call.1} parent=43 // pred_check
          %p226 = pneg %p112
        $region46: #{tpu_custom_call.1} parent=43 // pred_check_branch
          %228 = sbr.rel (%p226) target = $region48
        $region47: #{tpu_custom_call.1} parent=43 // pred_region
          %s229 = sand.u32 %s97, 1
          %s230 = scalar_lea.sflag [#allocation4], %s229
          %s231 = sand.u32 %s97, 1
          %s232 = smul.addr %s231, 8
          %s233 = scalar_lea.vmem [#allocation5], %s232
          %234 = dma.done %s230, 128
        $region48: #{tpu_custom_call.1} parent=43 // pred_fallthru
          _
      $region44: #{tpu_custom_call.1} parent=5 // pred_fallthru
        _
    $region6: #{tpu_custom_call.1} parent=1 // loop_footer
      %s19 = sadd.s32 1, %s15
    $region7: #{tpu_custom_call.1} parent=1 // loop_footer_branch
      %14 = sbr.rel target = $region3
    $region8: #{tpu_custom_call.1} parent=1 // loop_exit
      _
    %235 = vsyncpa [#allocation3], 1
    %s236 = scalar_lea.sflag [#allocation3], 1
    %237 = vsyncpa %s236, 1
    %238 = vsyncpa [#allocation4], 1
    %s239 = scalar_lea.sflag [#allocation4], 1
    %240 = vsyncpa %s239, 1

</llo_original>
